<compile_context>
chip_gen: v5e
topology: v5e:2x2
jax: 0.10.0
libtpu: 0.0.40
codegen_flags: <defaults>
</compile_context>

<pallas_src>
import functools

import jax
import jax.numpy as jnp
from jax.experimental import pallas as pl
from jax.experimental.pallas import tpu as pltpu


def _round_up(x, m):
    return (x + m - 1) // m * m


def _make_fc_sigmoid_kernel(k_axis):
    """Build the kernel; k_axis is the grid axis carrying the feat_dim reduction."""

    def kernel(x_ref, w_ref, b_ref, o_ref, acc_ref):
        k = pl.program_id(k_axis)

        @pl.when(k == 0)
        def _():
            acc_ref[...] = jnp.zeros_like(acc_ref)

        # x tile: (tm, tk); w tile: (tn, tk) in PyTorch layout.
        # Contract last dims of both -> (tm, tn); f32 accumulation on the MXU.
        acc_ref[...] += jax.lax.dot_general(
            x_ref[...],
            w_ref[...],
            dimension_numbers=(((1,), (1,)), ((), ())),
            preferred_element_type=jnp.float32,
        )

        @pl.when(k == pl.num_programs(k_axis) - 1)
        def _():
            logits = acc_ref[...] + b_ref[...].astype(jnp.float32)  # (tm,tn)+(1,tn)
            o_ref[...] = jax.nn.sigmoid(logits).astype(o_ref.dtype)

    return kernel


@functools.partial(
    jax.jit, static_argnames=("tm", "tn", "tk", "small_batch_limit")
)
def dot_product_classifier(
    x, weight, bias, *, tm=256, tn=512, tk=512, small_batch_limit=256
):
    """x: (B, feat_dim); weight: (num_classes, feat_dim); bias: (num_classes,)."""
    B, feat_dim = x.shape
    num_classes, fd2 = weight.shape
    assert fd2 == feat_dim, "weight must be (num_classes, feat_dim)"

    # Effective tile sizes, capped at the (128-aligned) problem size.
    tn_eff = min(tn, _round_up(num_classes, 128))
    tk_eff = min(tk, _round_up(feat_dim, 128))

    Cp = _round_up(num_classes, tn_eff)
    Fp = _round_up(feat_dim, tk_eff)

    # Zero-pad to tile multiples (no-op / elided when already aligned).
    if Fp != feat_dim:
        x = jnp.pad(x, ((0, 0), (0, Fp - feat_dim)))
        weight = jnp.pad(weight, ((0, 0), (0, Fp - feat_dim)))
    if Cp != num_classes:
        weight = jnp.pad(weight, ((0, Cp - num_classes), (0, 0)))
        bias = jnp.pad(bias, ((0, Cp - num_classes),))
    b2 = bias.reshape(1, Cp)  # 2-D so it tiles cleanly into VMEM

    if B <= small_batch_limit:
        # x fully VMEM-resident along the batch dim; only the weight streams.
        grid = (Cp // tn_eff, Fp // tk_eff)  # (classes, feat) — reduction last
        out = pl.pallas_call(
            _make_fc_sigmoid_kernel(k_axis=1),
            out_shape=jax.ShapeDtypeStruct((B, Cp), x.dtype),
            grid_spec=pltpu.PrefetchScalarGridSpec(
                num_scalar_prefetch=0,
                grid=grid,
                in_specs=[
                    pl.BlockSpec((B, tk_eff), lambda j, k: (0, k)),       # x
                    pl.BlockSpec((tn_eff, tk_eff), lambda j, k: (j, k)),  # W
                    pl.BlockSpec((1, tn_eff), lambda j, k: (0, j)),       # bias
                ],
                out_specs=pl.BlockSpec((B, tn_eff), lambda j, k: (0, j)),
                scratch_shapes=[pltpu.VMEM((B, tn_eff), jnp.float32)],
            ),
            compiler_params=pltpu.CompilerParams(
                dimension_semantics=("parallel", "arbitrary")
            ),
        )(x, weight, b2)
        return out[:, :num_classes]

    # Large-batch path: tile the batch dim too.
    tm_eff = min(tm, _round_up(B, 8))
    Bp = _round_up(B, tm_eff)
    if Bp != B:
        x = jnp.pad(x, ((0, Bp - B), (0, 0)))

    grid = (Bp // tm_eff, Cp // tn_eff, Fp // tk_eff)
    out = pl.pallas_call(
        _make_fc_sigmoid_kernel(k_axis=2),
        out_shape=jax.ShapeDtypeStruct((Bp, Cp), x.dtype),
        grid_spec=pltpu.PrefetchScalarGridSpec(
            num_scalar_prefetch=0,
            grid=grid,
            in_specs=[
                pl.BlockSpec((tm_eff, tk_eff), lambda i, j, k: (i, k)),   # x
                pl.BlockSpec((tn_eff, tk_eff), lambda i, j, k: (j, k)),   # W
                pl.BlockSpec((1, tn_eff), lambda i, j, k: (0, j)),        # bias
            ],
            out_specs=pl.BlockSpec((tm_eff, tn_eff), lambda i, j, k: (i, j)),
            scratch_shapes=[pltpu.VMEM((tm_eff, tn_eff), jnp.float32)],
        ),
        compiler_params=pltpu.CompilerParams(
            dimension_semantics=("parallel", "parallel", "arbitrary")
        ),
    )(x, weight, b2)
    return out[:B, :num_classes]


def init_params(key, feat_dim, num_classes, dtype=jnp.float32):
    """Xavier-uniform weight (matches reset_parameters) and zero bias."""
    if num_classes == 2:  # same remap as the PyTorch module's __init__
        num_classes = 1
    limit = jnp.sqrt(6.0 / (feat_dim + num_classes))
    weight = jax.random.uniform(
        key, (num_classes, feat_dim), dtype=dtype, minval=-limit, maxval=limit
    )
    bias = jnp.zeros((num_classes,), dtype=dtype)
    return weight, bias


if __name__ == "__main__":
    key = jax.random.PRNGKey(0)
    kx, kw = jax.random.split(key)

    # Small but representative classifier-head shapes: exercises the
    # small-batch (x-resident) path and the num_classes=1000 -> 1024 padding.
    B, feat_dim, num_classes = 16, 512, 1000

    x = jax.random.normal(kx, (B, feat_dim), dtype=jnp.float32)
    weight, bias = init_params(kw, feat_dim, num_classes)

    out = dot_product_classifier(x, weight, bias)
    out = jax.block_until_ready(out)

    # Reference check (plain JAX) for forward-pass semantics.
    ref = jax.nn.sigmoid(x @ weight.T + bias)
    assert out.shape == (B, num_classes)
    assert jnp.allclose(out, ref, atol=1e-4, rtol=1e-4)

    print("KERNEL_OK")
</pallas_src>

<mosaic_0001>
module attributes {stable_mosaic.version = 11 : i64} {
  func.func @kernel(%arg0: i32, %arg1: i32, %arg2: memref<16x512xf32, #tpu.memory_space<vmem>>, %arg3: memref<512x512xf32, #tpu.memory_space<vmem>>, %arg4: memref<1x512xf32, #tpu.memory_space<vmem>>, %arg5: memref<16x512xf32, #tpu.memory_space<vmem>>, %arg6: memref<16x512xf32, #tpu.memory_space<vmem>>) attributes {dimension_semantics = [#tpu.dimension_semantics<parallel>, #tpu.dimension_semantics<arbitrary>], iteration_bounds = array<i64: 2, 1>, scalar_prefetch = 0 : i64, scratch_operands = 1 : i64, tpu.core_type = #tpu.core_type<tc>, window_params = [{transform_indices = @transform_0, window_bounds = array<i64: 16, 512>}, {transform_indices = @transform_1, window_bounds = array<i64: 512, 512>}, {transform_indices = @transform_2, window_bounds = array<i64: 1, 512>}, {transform_indices = @transform_3, window_bounds = array<i64: 16, 512>}]} {
    %c0_i32 = arith.constant 0 : i32
    %0 = arith.cmpi eq, %arg1, %c0_i32 : i32
    %1 = arith.extui %0 : i1 to i32
    %c0_i32_0 = arith.constant 0 : i32
    %2 = arith.cmpi ne, %1, %c0_i32_0 : i32
    scf.if %2 {
      %cst_10 = arith.constant 0.000000e+00 : f32
      %12 = vector.broadcast %cst_10 : f32 to vector<16x512xf32>
      %c0_11 = arith.constant 0 : index
      %c0_12 = arith.constant 0 : index
      %13 = vector.load %arg6[%c0_11, %c0_12] : memref<16x512xf32, #tpu.memory_space<vmem>>, vector<16x512xf32>
      tpu.vector_store %arg6[%c0_11, %c0_12], %12 {strides = array<i32>} : memref<16x512xf32, #tpu.memory_space<vmem>>, vector<16x512xf32>,
    } else {
    }
    %c0 = arith.constant 0 : index
    %c0_1 = arith.constant 0 : index
    %3 = vector.load %arg6[%c0, %c0_1] : memref<16x512xf32, #tpu.memory_space<vmem>>, vector<16x512xf32>
    %c0_2 = arith.constant 0 : index
    %c0_3 = arith.constant 0 : index
    %4 = vector.load %arg2[%c0_2, %c0_3] : memref<16x512xf32, #tpu.memory_space<vmem>>, vector<16x512xf32>
    %c0_4 = arith.constant 0 : index
    %c0_5 = arith.constant 0 : index
    %5 = vector.load %arg3[%c0_4, %c0_5] : memref<512x512xf32, #tpu.memory_space<vmem>>, vector<512x512xf32>
    %cst = arith.constant dense<0.000000e+00> : vector<16x512xf32>
    %6 = tpu.matmul %4, %5, %cst {dimension_numbers = #tpu.dot_dimension_numbers<[1], [1], [0], [0], [0, 0, 1, 0], [], []>} : vector<16x512xf32>, vector<512x512xf32>, vector<16x512xf32> -> vector<16x512xf32>
    %7 = arith.addf %3, %6 : vector<16x512xf32>
    %c0_6 = arith.constant 0 : index
    %c0_7 = arith.constant 0 : index
    %8 = vector.load %arg6[%c0_6, %c0_7] : memref<16x512xf32, #tpu.memory_space<vmem>>, vector<16x512xf32>
    tpu.vector_store %arg6[%c0_6, %c0_7], %7 {strides = array<i32>} : memref<16x512xf32, #tpu.memory_space<vmem>>, vector<16x512xf32>,
    %c0_i32_8 = arith.constant 0 : i32
    %9 = arith.cmpi eq, %arg1, %c0_i32_8 : i32
    %10 = arith.extui %9 : i1 to i32
    %c0_i32_9 = arith.constant 0 : i32
    %11 = arith.cmpi ne, %10, %c0_i32_9 : i32
    scf.if %11 {
      %c0_10 = arith.constant 0 : index
      %c0_11 = arith.constant 0 : index
      %12 = vector.load %arg6[%c0_10, %c0_11] : memref<16x512xf32, #tpu.memory_space<vmem>>, vector<16x512xf32>
      %c0_12 = arith.constant 0 : index
      %c0_13 = arith.constant 0 : index
      %13 = vector.load %arg4[%c0_12, %c0_13] : memref<1x512xf32, #tpu.memory_space<vmem>>, vector<1x512xf32>
      %14 = vector.broadcast %13 : vector<1x512xf32> to vector<16x512xf32>
      %15 = arith.addf %12, %14 : vector<16x512xf32>
      %16 = arith.negf %15 : vector<16x512xf32>
      %17 = math.exp %16 : vector<16x512xf32>
      %cst_14 = arith.constant 1.000000e+00 : f32
      %18 = vector.broadcast %cst_14 : f32 to vector<16x512xf32>
      %19 = arith.addf %18, %17 : vector<16x512xf32>
      %20 = arith.divf %18, %19 : vector<16x512xf32>
      %c0_15 = arith.constant 0 : index
      %c0_16 = arith.constant 0 : index
      %21 = vector.load %arg5[%c0_15, %c0_16] : memref<16x512xf32, #tpu.memory_space<vmem>>, vector<16x512xf32>
      tpu.vector_store %arg5[%c0_15, %c0_16], %20 {strides = array<i32>} : memref<16x512xf32, #tpu.memory_space<vmem>>, vector<16x512xf32>,
    } else {
    }
    return
  }
  func.func @transform_0(%arg0: i32, %arg1: i32) -> (i32, i32) {
    %c0_i32 = arith.constant 0 : i32
    %c0_i32_0 = arith.constant 0 : i32
    return %c0_i32, %arg1 : i32, i32
  }
  func.func @transform_1(%arg0: i32, %arg1: i32) -> (i32, i32) {
    %c0_i32 = arith.constant 0 : i32
    return %arg0, %arg1 : i32, i32
  }
  func.func @transform_2(%arg0: i32, %arg1: i32) -> (i32, i32) {
    %c0_i32 = arith.constant 0 : i32
    %c0_i32_0 = arith.constant 0 : i32
    return %c0_i32, %arg0 : i32, i32
  }
  func.func @transform_3(%arg0: i32, %arg1: i32) -> (i32, i32) {
    %c0_i32 = arith.constant 0 : i32
    %c0_i32_0 = arith.constant 0 : i32
    return %c0_i32, %arg0 : i32, i32
  }
}

</mosaic_0001>

<llo_original>
// kernel: dot_product_classifier.1
$region0: #{dot_product_classifier.1}
  #allocation0 [shape = 'u32[]', space=smem, size = 0x4, offset = 0x4, fixed_abs, tag = 'smem constant byte address 0x4 - core index']
  #allocation1 [shape = 'u32[72,128]{1,0:T(1,128)}', space=vmem, size = 0x9000, scoped, tag = 'internal scratch']
  #allocation2 [shape = 'f32[16,512]{1,0:T(8,128)}', space=vmem, size = 0x8000, scoped, tag = 'scratch operand']
  %s0 = inlined_call_operand.vmem [shape: f32[16,512], index: 0, kind: input, shape index: {}]
  %s1 = inlined_call_operand.vmem [shape: f32[1024,512], index: 1, kind: input, shape index: {}]
  %s2 = inlined_call_operand.vmem [shape: f32[1,1024], index: 2, kind: input, shape index: {}]
  %s3 = inlined_call_operand.hbm [shape: f32[16,1024], index: 3, kind: output, shape index: {}]
  %s4 = sld [smem:[#allocation0]]
  $region53: #{dot_product_classifier.1} parent=0
    _
  %s6 = ssub.s32 1, %s4
  %s7 = scalar_select 0, %s6, %s4
  $region1: #{dot_product_classifier.1} parent=0
    #allocation3 [shape = 'u8[65536]{0}', space=vmem, size = 0x10000, scoped, tag = 'output window, operand 0']
    #allocation4 [shape = 's32[2]{0}', space=sflag, size = 0x8, scoped, tag = 'scoped memory for dot_product_classifier.1']
    %8 = vsyncpa [#allocation4], 0
    %s9 = scalar_lea.sflag [#allocation4], 1
    %10 = vsyncpa %s9, 0
    loop: start=0, step=1, limit=4
    $region2: #{dot_product_classifier.1} parent=1 // loop_pre_header
      _
    $region3: #{dot_product_classifier.1} parent=1 // loop_header
      %s12 = sphi 0, %s16
      %p13 = scmp.ge.s32.totalorder %s12, 4
      %s19 = sphi 0, %s31
      %s20 = sphi 0, %s27
      %s21 = sphi 0, %s19
      %s22 = sphi 0, %s20
      %s23 = sphi 0, %s21
      %s24 = sphi 0, %s22
      %s34 = sphi 0, %s36
      %s37 = sphi 0, %s34
      %s38 = sphi 0, %s37
      %s54 = sphi 0, %s38
      %s62 = sphi 0, %s64
      %s65 = sphi 0, %s62
      %s66 = sphi 0, %s65
      %s82 = sphi 0, %s66
      %s88 = sphi 0, %s90
      %s91 = sphi 0, %s88
      %s92 = sphi 0, %s91
      %s108 = sphi 0, %s92
      %s114 = sphi 0, %s116
      %s117 = sphi 0, %s114
      %s118 = sphi 0, %s117
      %s134 = sphi 0, %s118
    $region4: #{dot_product_classifier.1} parent=1 // loop_header_branch
      %15 = sbr.rel (%p13) target = $region8
    $region5: #{dot_product_classifier.1} parent=1 // loop_body
      %s17 = ssub.s32 %s12, 1
      %s18 = ssub.s32 %s12, 2
      %s25 = sadd.s32 1, %s20
      %p26 = scmp.ge.s32.totalorder %s25, 1
      %s27 = scalar_select %p26, 0, %s25
      %s28 = sadd.s32 1, %s19
      %s29 = scalar_select %p26, %s28, %s19
      %p30 = scmp.ge.s32.totalorder %s29, 2
      %s31 = scalar_select %p30, 0, %s29
      %s32 = ssub.s32 %s20, %s27
      %p33 = scmp.eq.s32.totalorder %s32, 0
      %s35 = sadd.s32 %s34, 1
      %s36 = scalar_select %p33, %s34, %s35
      %p39 = pneg %p33
      %p40 = scmp.eq.s32.totalorder %s12, 1
      %p41 = por %p39, %p40
      %p42 = scmp.ne.s32.totalorder %s34, %s37
      %p43 = scmp.eq.s32.totalorder %s12, 0
      %p44 = por %p42, %p43
      %p45 = scmp.ne.s32.totalorder %s34, %s37
      %p46 = scmp.eq.s32.totalorder %s17, 1
      %p47 = por %p45, %p46
      %p48 = scmp.ne.s32.totalorder %s37, %s38
      %p49 = scmp.eq.s32.totalorder %s17, 0
      %p50 = por %p48, %p49
      %p51 = scmp.ne.s32.totalorder %s37, %s38
      %p52 = scmp.eq.s32.totalorder %s18, 1
      %p53 = por %p51, %p52
      %p55 = scmp.ne.s32.totalorder %s38, %s54
      %p56 = scmp.eq.s32.totalorder %s18, 0
      %p57 = por %p55, %p56
      %s58 = ssub.s32 %s19, %s31
      %s59 = ssub.s32 %s20, %s27
      %s60 = sor.u32 %s58, %s59
      %p61 = scmp.eq.s32.totalorder %s60, 0
      %s63 = sadd.s32 %s62, 1
      %s64 = scalar_select %p61, %s62, %s63
      %p67 = pneg %p61
      %p68 = scmp.eq.s32.totalorder %s12, 1
      %p69 = por %p67, %p68
      %p70 = scmp.ne.s32.totalorder %s62, %s65
      %p71 = scmp.eq.s32.totalorder %s12, 0
      %p72 = por %p70, %p71
      %p73 = scmp.ne.s32.totalorder %s62, %s65
      %p74 = scmp.eq.s32.totalorder %s17, 1
      %p75 = por %p73, %p74
      %p76 = scmp.ne.s32.totalorder %s65, %s66
      %p77 = scmp.eq.s32.totalorder %s17, 0
      %p78 = por %p76, %p77
      %p79 = scmp.ne.s32.totalorder %s65, %s66
      %p80 = scmp.eq.s32.totalorder %s18, 1
      %p81 = por %p79, %p80
      %p83 = scmp.ne.s32.totalorder %s66, %s82
      %p84 = scmp.eq.s32.totalorder %s18, 0
      %p85 = por %p83, %p84
      %s86 = ssub.s32 %s19, %s31
      %p87 = scmp.eq.s32.totalorder %s86, 0
      %s89 = sadd.s32 %s88, 1
      %s90 = scalar_select %p87, %s88, %s89
      %p93 = pneg %p87
      %p94 = scmp.eq.s32.totalorder %s12, 1
      %p95 = por %p93, %p94
      %p96 = scmp.ne.s32.totalorder %s88, %s91
      %p97 = scmp.eq.s32.totalorder %s12, 0
      %p98 = por %p96, %p97
      %p99 = scmp.ne.s32.totalorder %s88, %s91
      %p100 = scmp.eq.s32.totalorder %s17, 1
      %p101 = por %p99, %p100
      %p102 = scmp.ne.s32.totalorder %s91, %s92
      %p103 = scmp.eq.s32.totalorder %s17, 0
      %p104 = por %p102, %p103
      %p105 = scmp.ne.s32.totalorder %s91, %s92
      %p106 = scmp.eq.s32.totalorder %s18, 1
      %p107 = por %p105, %p106
      %p109 = scmp.ne.s32.totalorder %s92, %s108
      %p110 = scmp.eq.s32.totalorder %s18, 0
      %p111 = por %p109, %p110
      %s112 = ssub.s32 %s19, %s31
      %p113 = scmp.eq.s32.totalorder %s112, 0
      %s115 = sadd.s32 %s114, 1
      %s116 = scalar_select %p113, %s114, %s115
      %p119 = pneg %p113
      %p120 = scmp.eq.s32.totalorder %s12, 1
      %p121 = por %p119, %p120
      %p122 = scmp.ne.s32.totalorder %s114, %s117
      %p123 = scmp.eq.s32.totalorder %s12, 0
      %p124 = por %p122, %p123
      %p125 = scmp.ne.s32.totalorder %s114, %s117
      %p126 = scmp.eq.s32.totalorder %s17, 1
      %p127 = por %p125, %p126
      %p128 = scmp.ne.s32.totalorder %s117, %s118
      %p129 = scmp.eq.s32.totalorder %s17, 0
      %p130 = por %p128, %p129
      %p131 = scmp.ne.s32.totalorder %s117, %s118
      %p132 = scmp.eq.s32.totalorder %s18, 1
      %p133 = por %p131, %p132
      %p135 = scmp.ne.s32.totalorder %s118, %s134
      %p136 = scmp.eq.s32.totalorder %s18, 0
      %p137 = por %p135, %p136
      %p138 = scmp.le.s32.totalorder 1, %s12
      %p139 = scmp.lt.s32.totalorder %s12, 3
      %p140 = pnand %p138, %p139
      %p141 = pneg %p140
      // Predicated region
      $region9: #{dot_product_classifier.1} parent=5 // pred_check
        _
      $region10: #{dot_product_classifier.1} parent=5 // pred_check_branch
        %143 = sbr.rel (%p140) target = $region12
      $region11: #{dot_product_classifier.1} parent=5 // pred_region
        %s144 = ssub.s32 %s12, 1
        // Predicated region
        $region13: #{dot_product_classifier.1} parent=11 // pred_check
          %p145 = pneg %p50
        $region14: #{dot_product_classifier.1} parent=11 // pred_check_branch
          %147 = sbr.rel (%p145) target = $region16
        $region15: #{dot_product_classifier.1} parent=11 // pred_region
          %s148 = smul.u32 4, %s22
          %p149 = scmp.lt.s32.totalorder %s148, 3
          %s150 = scalar_select %p149, %s148, 3
          %s151 = smul.addr %s150, 8
          %s152 = scalar_lea.vmem %s0, %s151
          %s153 = smul.u32 4, %s22
        $region16: #{dot_product_classifier.1} parent=11 // pred_fallthru
          _
      $region12: #{dot_product_classifier.1} parent=5 // pred_fallthru
        _
      %p154 = scmp.lt.s32.totalorder %s12, 2
      // Predicated region
      $region17: #{dot_product_classifier.1} parent=5 // pred_check
        %p155 = pneg %p154
      $region18: #{dot_product_classifier.1} parent=5 // pred_check_branch
        %157 = sbr.rel (%p155) target = $region20
      $region19: #{dot_product_classifier.1} parent=5 // pred_region
        // Predicated region
        $region21: #{dot_product_classifier.1} parent=19 // pred_check
          %p158 = pneg %p72
        $region22: #{dot_product_classifier.1} parent=19 // pred_check_branch
          %160 = sbr.rel (%p158) target = $region24
        $region23: #{dot_product_classifier.1} parent=19 // pred_region
          %s161 = smul.u32 64, %s19
          %s162 = smul.u32 4, %s20
          %p163 = scmp.lt.s32.totalorder %s161, 127
          %s164 = scalar_select %p163, %s161, 127
          %p165 = scmp.lt.s32.totalorder %s162, 3
          %s166 = scalar_select %p165, %s162, 3
          %s167 = smul.addr %s164, 4
          %s168 = sadd.s32 %s166, %s167
          %s169 = smul.addr %s168, 8
          %s170 = scalar_lea.vmem %s1, %s169
          %s171 = smul.u32 64, %s19
          %s172 = smul.u32 4, %s20
        $region24: #{dot_product_classifier.1} parent=19 // pred_fallthru
          _
        // Predicated region
        $region25: #{dot_product_classifier.1} parent=19 // pred_check
          %p173 = pneg %p98
        $region26: #{dot_product_classifier.1} parent=19 // pred_check_branch
          %175 = sbr.rel (%p173) target = $region28
        $region27: #{dot_product_classifier.1} parent=19 // pred_region
          %s176 = smul.u32 4, %s19
          %p177 = scmp.lt.s32.totalorder %s176, 7
          %s178 = scalar_select %p177, %s176, 7
          %s179 = scalar_lea.vmem %s2, %s178
          %s180 = smul.u32 4, %s19
        $region28: #{dot_product_classifier.1} parent=19 // pred_fallthru
          _
      $region20: #{dot_product_classifier.1} parent=5 // pred_fallthru
        _
      %p181 = scmp.le.s32.totalorder 1, %s12
      %p182 = scmp.lt.s32.totalorder %s12, 3
      %p183 = pnand %p181, %p182
      %p184 = pneg %p183
      // Predicated region
      $region29: #{dot_product_classifier.1} parent=5 // pred_check
        _
      $region30: #{dot_product_classifier.1} parent=5 // pred_check_branch
        %186 = sbr.rel (%p183) target = $region32
      $region31: #{dot_product_classifier.1} parent=5 // pred_region
        %s187 = ssub.s32 %s12, 1
        %s188 = smul.u32 4, %s22
        %p189 = scmp.lt.s32.totalorder %s188, 3
        %s190 = scalar_select %p189, %s188, 3
        %s191 = smul.addr %s190, 8
        %s192 = scalar_lea.vmem %s0, %s191
        %p193 = pneg %p50
        %p194 = pneg %p47
        %s195 = smul.u32 64, %s21
        %s196 = smul.u32 4, %s22
        %p197 = scmp.lt.s32.totalorder %s195, 127
        %s198 = scalar_select %p197, %s195, 127
        %p199 = scmp.lt.s32.totalorder %s196, 3
        %s200 = scalar_select %p199, %s196, 3
        %s201 = smul.addr %s198, 4
        %s202 = sadd.s32 %s200, %s201
        %s203 = smul.addr %s202, 8
        %s204 = scalar_lea.vmem %s1, %s203
        %p205 = pneg %p78
        %p206 = pneg %p75
        %s207 = smul.u32 4, %s21
        %p208 = scmp.lt.s32.totalorder %s207, 7
        %s209 = scalar_select %p208, %s207, 7
        %s210 = scalar_lea.vmem %s2, %s209
        %p211 = pneg %p104
        %p212 = pneg %p101
        %p213 = pneg %p130
        %p214 = pneg %p127
        %s215 = sand.u32 %s117, 1
        %s216 = scalar_lea.sflag [#allocation4], %s215
        %s217 = sand.u32 %s117, 1
        %s218 = smul.addr %s217, 64
        %s219 = scalar_lea.vmem [#allocation3], %s218
        %s220 = smul.u32 4, %s22
        %p221 = scmp.lt.s32.totalorder %s220, 3
        %s222 = scalar_select %p221, %s220, 3
        %s223 = smul.addr %s222, 8
        %s224 = scalar_lea.vmem %s0, %s223
        %s225 = smul.u32 4, %s22
        %s226 = smul.u32 64, %s21
        %s227 = smul.u32 4, %s22
        %p228 = scmp.lt.s32.totalorder %s226, 127
        %s229 = scalar_select %p228, %s226, 127
        %p230 = scmp.lt.s32.totalorder %s227, 3
        %s231 = scalar_select %p230, %s227, 3
        %s232 = smul.addr %s229, 4
        %s233 = sadd.s32 %s231, %s232
        %s234 = smul.addr %s233, 8
        %s235 = scalar_lea.vmem %s1, %s234
        %s236 = smul.u32 64, %s21
        %s237 = smul.u32 4, %s22
        %s238 = smul.u32 4, %s21
        %p239 = scmp.lt.s32.totalorder %s238, 7
        %s240 = scalar_select %p239, %s238, 7
        %s241 = scalar_lea.vmem %s2, %s240
        %s242 = smul.u32 4, %s21
        %s243 = smul.u32 4, %s21
        %p244 = scmp.eq.s32.totalorder %s22, 0
        // Predicated region
        $region33: #{dot_product_classifier.1} parent=31 // pred_check
          %p245 = pneg %p244
        $region34: #{dot_product_classifier.1} parent=31 // pred_check_branch
          %247 = sbr.rel (%p245) target = $region36
        $region35: #{dot_product_classifier.1} parent=31 // pred_region
          %248 = vst [vmem:[#allocation2] sm:$0xff] 0.0
          %249 = vst [vmem:[#allocation2 + $0x8] sm:$0xff] 0.0
          %250 = vst [vmem:[#allocation2 + $0x10] sm:$0xff] 0.0
          %251 = vst [vmem:[#allocation2 + $0x18] sm:$0xff] 0.0
          %252 = vst [vmem:[#allocation2 + $0x20] sm:$0xff] 0.0
          %253 = vst [vmem:[#allocation2 + $0x28] sm:$0xff] 0.0
          %254 = vst [vmem:[#allocation2 + $0x30] sm:$0xff] 0.0
          %255 = vst [vmem:[#allocation2 + $0x38] sm:$0xff] 0.0
        $region36: #{dot_product_classifier.1} parent=31 // pred_fallthru
          _
        %v256 = vld [vmem:[#allocation2] sm:$0xff]
        %v257 = vld [vmem:[#allocation2 + $0x8] sm:$0xff]
        %v258 = vld [vmem:[#allocation2 + $0x10] sm:$0xff]
        %v259 = vld [vmem:[#allocation2 + $0x18] sm:$0xff]
        %v260 = vld [vmem:[#allocation2 + $0x20] sm:$0xff]
        %v261 = vld [vmem:[#allocation2 + $0x28] sm:$0xff]
        %v262 = vld [vmem:[#allocation2 + $0x30] sm:$0xff]
        %v263 = vld [vmem:[#allocation2 + $0x38] sm:$0xff]
        %v264 = vld [vmem:[%s224] sm:$0xff]
        %v265 = vld [vmem:[%s224 + $0x8] sm:$0xff]
        %v266 = vld [vmem:[%s224 + $0x10] sm:$0xff]
        %v267 = vld [vmem:[%s224 + $0x18] sm:$0xff]
        %v268 = vld [vmem:[%s224 + $0x20] sm:$0xff]
        %v269 = vld [vmem:[%s224 + $0x28] sm:$0xff]
        %v270 = vld [vmem:[%s224 + $0x30] sm:$0xff]
        %v271 = vld [vmem:[%s224 + $0x38] sm:$0xff]
        %v272 = vld [vmem:[%s235] sm:$0xff]
        %v273 = vld [vmem:[%s235 + $0x8] sm:$0xff]
        %v274 = vld [vmem:[%s235 + $0x10] sm:$0xff]
        %v275 = vld [vmem:[%s235 + $0x18] sm:$0xff]
        %v276 = vld [vmem:[%s235 + $0x20] sm:$0xff]
        %v277 = vld [vmem:[%s235 + $0x28] sm:$0xff]
        %v278 = vld [vmem:[%s235 + $0x30] sm:$0xff]
        %v279 = vld [vmem:[%s235 + $0x38] sm:$0xff]
        %v280 = vld [vmem:[%s235 + $0x40] sm:$0xff]
        %v281 = vld [vmem:[%s235 + $0x48] sm:$0xff]
        %v282 = vld [vmem:[%s235 + $0x50] sm:$0xff]
        %v283 = vld [vmem:[%s235 + $0x58] sm:$0xff]
        %v284 = vld [vmem:[%s235 + $0x60] sm:$0xff]
        %v285 = vld [vmem:[%s235 + $0x68] sm:$0xff]
        %v286 = vld [vmem:[%s235 + $0x70] sm:$0xff]
        %v287 = vld [vmem:[%s235 + $0x78] sm:$0xff]
        %v288 = vld [vmem:[%s235 + $0x80] sm:$0xff]
        %v289 = vld [vmem:[%s235 + $0x88] sm:$0xff]
        %v290 = vld [vmem:[%s235 + $0x90] sm:$0xff]
        %v291 = vld [vmem:[%s235 + $0x98] sm:$0xff]
        %v292 = vld [vmem:[%s235 + $0xa0] sm:$0xff]
        %v293 = vld [vmem:[%s235 + $0xa8] sm:$0xff]
        %v294 = vld [vmem:[%s235 + $0xb0] sm:$0xff]
        %v295 = vld [vmem:[%s235 + $0xb8] sm:$0xff]
        %v296 = vld [vmem:[%s235 + $0xc0] sm:$0xff]
        %v297 = vld [vmem:[%s235 + $0xc8] sm:$0xff]
        %v298 = vld [vmem:[%s235 + $0xd0] sm:$0xff]
        %v299 = vld [vmem:[%s235 + $0xd8] sm:$0xff]
        %v300 = vld [vmem:[%s235 + $0xe0] sm:$0xff]
        %v301 = vld [vmem:[%s235 + $0xe8] sm:$0xff]
        %v302 = vld [vmem:[%s235 + $0xf0] sm:$0xff]
        %v303 = vld [vmem:[%s235 + $0xf8] sm:$0xff]
        %v304 = vld [vmem:[%s235 + $0x100] sm:$0xff]
        %v305 = vld [vmem:[%s235 + $0x108] sm:$0xff]
        %v306 = vld [vmem:[%s235 + $0x110] sm:$0xff]
        %v307 = vld [vmem:[%s235 + $0x118] sm:$0xff]
        %v308 = vld [vmem:[%s235 + $0x120] sm:$0xff]
        %v309 = vld [vmem:[%s235 + $0x128] sm:$0xff]
        %v310 = vld [vmem:[%s235 + $0x130] sm:$0xff]
        %v311 = vld [vmem:[%s235 + $0x138] sm:$0xff]
        %v312 = vld [vmem:[%s235 + $0x140] sm:$0xff]
        %v313 = vld [vmem:[%s235 + $0x148] sm:$0xff]
        %v314 = vld [vmem:[%s235 + $0x150] sm:$0xff]
        %v315 = vld [vmem:[%s235 + $0x158] sm:$0xff]
        %v316 = vld [vmem:[%s235 + $0x160] sm:$0xff]
        %v317 = vld [vmem:[%s235 + $0x168] sm:$0xff]
        %v318 = vld [vmem:[%s235 + $0x170] sm:$0xff]
        %v319 = vld [vmem:[%s235 + $0x178] sm:$0xff]
        %v320 = vld [vmem:[%s235 + $0x180] sm:$0xff]
        %v321 = vld [vmem:[%s235 + $0x188] sm:$0xff]
        %v322 = vld [vmem:[%s235 + $0x190] sm:$0xff]
        %v323 = vld [vmem:[%s235 + $0x198] sm:$0xff]
        %v324 = vld [vmem:[%s235 + $0x1a0] sm:$0xff]
        %v325 = vld [vmem:[%s235 + $0x1a8] sm:$0xff]
        %v326 = vld [vmem:[%s235 + $0x1b0] sm:$0xff]
        %v327 = vld [vmem:[%s235 + $0x1b8] sm:$0xff]
        %v328 = vld [vmem:[%s235 + $0x1c0] sm:$0xff]
        %v329 = vld [vmem:[%s235 + $0x1c8] sm:$0xff]
        %v330 = vld [vmem:[%s235 + $0x1d0] sm:$0xff]
        %v331 = vld [vmem:[%s235 + $0x1d8] sm:$0xff]
        %v332 = vld [vmem:[%s235 + $0x1e0] sm:$0xff]
        %v333 = vld [vmem:[%s235 + $0x1e8] sm:$0xff]
        %v334 = vld [vmem:[%s235 + $0x1f0] sm:$0xff]
        %v335 = vld [vmem:[%s235 + $0x1f8] sm:$0xff]
        %v336 = vld [vmem:[%s235 + $0x200] sm:$0xff]
        %v337 = vld [vmem:[%s235 + $0x208] sm:$0xff]
        %v338 = vld [vmem:[%s235 + $0x210] sm:$0xff]
        %v339 = vld [vmem:[%s235 + $0x218] sm:$0xff]
        %v340 = vld [vmem:[%s235 + $0x220] sm:$0xff]
        %v341 = vld [vmem:[%s235 + $0x228] sm:$0xff]
        %v342 = vld [vmem:[%s235 + $0x230] sm:$0xff]
        %v343 = vld [vmem:[%s235 + $0x238] sm:$0xff]
        %v344 = vld [vmem:[%s235 + $0x240] sm:$0xff]
        %v345 = vld [vmem:[%s235 + $0x248] sm:$0xff]
        %v346 = vld [vmem:[%s235 + $0x250] sm:$0xff]
        %v347 = vld [vmem:[%s235 + $0x258] sm:$0xff]
        %v348 = vld [vmem:[%s235 + $0x260] sm:$0xff]
        %v349 = vld [vmem:[%s235 + $0x268] sm:$0xff]
        %v350 = vld [vmem:[%s235 + $0x270] sm:$0xff]
        %v351 = vld [vmem:[%s235 + $0x278] sm:$0xff]
        %v352 = vld [vmem:[%s235 + $0x280] sm:$0xff]
        %v353 = vld [vmem:[%s235 + $0x288] sm:$0xff]
        %v354 = vld [vmem:[%s235 + $0x290] sm:$0xff]
        %v355 = vld [vmem:[%s235 + $0x298] sm:$0xff]
        %v356 = vld [vmem:[%s235 + $0x2a0] sm:$0xff]
        %v357 = vld [vmem:[%s235 + $0x2a8] sm:$0xff]
        %v358 = vld [vmem:[%s235 + $0x2b0] sm:$0xff]
        %v359 = vld [vmem:[%s235 + $0x2b8] sm:$0xff]
        %v360 = vld [vmem:[%s235 + $0x2c0] sm:$0xff]
        %v361 = vld [vmem:[%s235 + $0x2c8] sm:$0xff]
        %v362 = vld [vmem:[%s235 + $0x2d0] sm:$0xff]
        %v363 = vld [vmem:[%s235 + $0x2d8] sm:$0xff]
        %v364 = vld [vmem:[%s235 + $0x2e0] sm:$0xff]
        %v365 = vld [vmem:[%s235 + $0x2e8] sm:$0xff]
        %v366 = vld [vmem:[%s235 + $0x2f0] sm:$0xff]
        %v367 = vld [vmem:[%s235 + $0x2f8] sm:$0xff]
        %v368 = vld [vmem:[%s235 + $0x300] sm:$0xff]
        %v369 = vld [vmem:[%s235 + $0x308] sm:$0xff]
        %v370 = vld [vmem:[%s235 + $0x310] sm:$0xff]
        %v371 = vld [vmem:[%s235 + $0x318] sm:$0xff]
        %v372 = vld [vmem:[%s235 + $0x320] sm:$0xff]
        %v373 = vld [vmem:[%s235 + $0x328] sm:$0xff]
        %v374 = vld [vmem:[%s235 + $0x330] sm:$0xff]
        %v375 = vld [vmem:[%s235 + $0x338] sm:$0xff]
        %v376 = vld [vmem:[%s235 + $0x340] sm:$0xff]
        %v377 = vld [vmem:[%s235 + $0x348] sm:$0xff]
        %v378 = vld [vmem:[%s235 + $0x350] sm:$0xff]
        %v379 = vld [vmem:[%s235 + $0x358] sm:$0xff]
        %v380 = vld [vmem:[%s235 + $0x360] sm:$0xff]
        %v381 = vld [vmem:[%s235 + $0x368] sm:$0xff]
        %v382 = vld [vmem:[%s235 + $0x370] sm:$0xff]
        %v383 = vld [vmem:[%s235 + $0x378] sm:$0xff]
        %v384 = vld [vmem:[%s235 + $0x380] sm:$0xff]
        %v385 = vld [vmem:[%s235 + $0x388] sm:$0xff]
        %v386 = vld [vmem:[%s235 + $0x390] sm:$0xff]
        %v387 = vld [vmem:[%s235 + $0x398] sm:$0xff]
        %v388 = vld [vmem:[%s235 + $0x3a0] sm:$0xff]
        %v389 = vld [vmem:[%s235 + $0x3a8] sm:$0xff]
        %v390 = vld [vmem:[%s235 + $0x3b0] sm:$0xff]
        %v391 = vld [vmem:[%s235 + $0x3b8] sm:$0xff]
        %v392 = vld [vmem:[%s235 + $0x3c0] sm:$0xff]
        %v393 = vld [vmem:[%s235 + $0x3c8] sm:$0xff]
        %v394 = vld [vmem:[%s235 + $0x3d0] sm:$0xff]
        %v395 = vld [vmem:[%s235 + $0x3d8] sm:$0xff]
        %v396 = vld [vmem:[%s235 + $0x3e0] sm:$0xff]
        %v397 = vld [vmem:[%s235 + $0x3e8] sm:$0xff]
        %v398 = vld [vmem:[%s235 + $0x3f0] sm:$0xff]
        %v399 = vld [vmem:[%s235 + $0x3f8] sm:$0xff]
        %v400 = vld [vmem:[%s235 + $0x400] sm:$0xff]
        %v401 = vld [vmem:[%s235 + $0x408] sm:$0xff]
        %v402 = vld [vmem:[%s235 + $0x410] sm:$0xff]
        %v403 = vld [vmem:[%s235 + $0x418] sm:$0xff]
        %v404 = vld [vmem:[%s235 + $0x420] sm:$0xff]
        %v405 = vld [vmem:[%s235 + $0x428] sm:$0xff]
        %v406 = vld [vmem:[%s235 + $0x430] sm:$0xff]
        %v407 = vld [vmem:[%s235 + $0x438] sm:$0xff]
        %v408 = vld [vmem:[%s235 + $0x440] sm:$0xff]
        %v409 = vld [vmem:[%s235 + $0x448] sm:$0xff]
        %v410 = vld [vmem:[%s235 + $0x450] sm:$0xff]
        %v411 = vld [vmem:[%s235 + $0x458] sm:$0xff]
        %v412 = vld [vmem:[%s235 + $0x460] sm:$0xff]
        %v413 = vld [vmem:[%s235 + $0x468] sm:$0xff]
        %v414 = vld [vmem:[%s235 + $0x470] sm:$0xff]
        %v415 = vld [vmem:[%s235 + $0x478] sm:$0xff]
        %v416 = vld [vmem:[%s235 + $0x480] sm:$0xff]
        %v417 = vld [vmem:[%s235 + $0x488] sm:$0xff]
        %v418 = vld [vmem:[%s235 + $0x490] sm:$0xff]
        %v419 = vld [vmem:[%s235 + $0x498] sm:$0xff]
        %v420 = vld [vmem:[%s235 + $0x4a0] sm:$0xff]
        %v421 = vld [vmem:[%s235 + $0x4a8] sm:$0xff]
        %v422 = vld [vmem:[%s235 + $0x4b0] sm:$0xff]
        %v423 = vld [vmem:[%s235 + $0x4b8] sm:$0xff]
        %v424 = vld [vmem:[%s235 + $0x4c0] sm:$0xff]
        %v425 = vld [vmem:[%s235 + $0x4c8] sm:$0xff]
        %v426 = vld [vmem:[%s235 + $0x4d0] sm:$0xff]
        %v427 = vld [vmem:[%s235 + $0x4d8] sm:$0xff]
        %v428 = vld [vmem:[%s235 + $0x4e0] sm:$0xff]
        %v429 = vld [vmem:[%s235 + $0x4e8] sm:$0xff]
        %v430 = vld [vmem:[%s235 + $0x4f0] sm:$0xff]
        %v431 = vld [vmem:[%s235 + $0x4f8] sm:$0xff]
        %v432 = vld [vmem:[%s235 + $0x500] sm:$0xff]
        %v433 = vld [vmem:[%s235 + $0x508] sm:$0xff]
        %v434 = vld [vmem:[%s235 + $0x510] sm:$0xff]
        %v435 = vld [vmem:[%s235 + $0x518] sm:$0xff]
        %v436 = vld [vmem:[%s235 + $0x520] sm:$0xff]
        %v437 = vld [vmem:[%s235 + $0x528] sm:$0xff]
        %v438 = vld [vmem:[%s235 + $0x530] sm:$0xff]
        %v439 = vld [vmem:[%s235 + $0x538] sm:$0xff]
        %v440 = vld [vmem:[%s235 + $0x540] sm:$0xff]
        %v441 = vld [vmem:[%s235 + $0x548] sm:$0xff]
        %v442 = vld [vmem:[%s235 + $0x550] sm:$0xff]
        %v443 = vld [vmem:[%s235 + $0x558] sm:$0xff]
        %v444 = vld [vmem:[%s235 + $0x560] sm:$0xff]
        %v445 = vld [vmem:[%s235 + $0x568] sm:$0xff]
        %v446 = vld [vmem:[%s235 + $0x570] sm:$0xff]
        %v447 = vld [vmem:[%s235 + $0x578] sm:$0xff]
        %v448 = vld [vmem:[%s235 + $0x580] sm:$0xff]
        %v449 = vld [vmem:[%s235 + $0x588] sm:$0xff]
        %v450 = vld [vmem:[%s235 + $0x590] sm:$0xff]
        %v451 = vld [vmem:[%s235 + $0x598] sm:$0xff]
        %v452 = vld [vmem:[%s235 + $0x5a0] sm:$0xff]
        %v453 = vld [vmem:[%s235 + $0x5a8] sm:$0xff]
        %v454 = vld [vmem:[%s235 + $0x5b0] sm:$0xff]
        %v455 = vld [vmem:[%s235 + $0x5b8] sm:$0xff]
        %v456 = vld [vmem:[%s235 + $0x5c0] sm:$0xff]
        %v457 = vld [vmem:[%s235 + $0x5c8] sm:$0xff]
        %v458 = vld [vmem:[%s235 + $0x5d0] sm:$0xff]
        %v459 = vld [vmem:[%s235 + $0x5d8] sm:$0xff]
        %v460 = vld [vmem:[%s235 + $0x5e0] sm:$0xff]
        %v461 = vld [vmem:[%s235 + $0x5e8] sm:$0xff]
        %v462 = vld [vmem:[%s235 + $0x5f0] sm:$0xff]
        %v463 = vld [vmem:[%s235 + $0x5f8] sm:$0xff]
        %v464 = vld [vmem:[%s235 + $0x600] sm:$0xff]
        %v465 = vld [vmem:[%s235 + $0x608] sm:$0xff]
        %v466 = vld [vmem:[%s235 + $0x610] sm:$0xff]
        %v467 = vld [vmem:[%s235 + $0x618] sm:$0xff]
        %v468 = vld [vmem:[%s235 + $0x620] sm:$0xff]
        %v469 = vld [vmem:[%s235 + $0x628] sm:$0xff]
        %v470 = vld [vmem:[%s235 + $0x630] sm:$0xff]
        %v471 = vld [vmem:[%s235 + $0x638] sm:$0xff]
        %v472 = vld [vmem:[%s235 + $0x640] sm:$0xff]
        %v473 = vld [vmem:[%s235 + $0x648] sm:$0xff]
        %v474 = vld [vmem:[%s235 + $0x650] sm:$0xff]
        %v475 = vld [vmem:[%s235 + $0x658] sm:$0xff]
        %v476 = vld [vmem:[%s235 + $0x660] sm:$0xff]
        %v477 = vld [vmem:[%s235 + $0x668] sm:$0xff]
        %v478 = vld [vmem:[%s235 + $0x670] sm:$0xff]
        %v479 = vld [vmem:[%s235 + $0x678] sm:$0xff]
        %v480 = vld [vmem:[%s235 + $0x680] sm:$0xff]
        %v481 = vld [vmem:[%s235 + $0x688] sm:$0xff]
        %v482 = vld [vmem:[%s235 + $0x690] sm:$0xff]
        %v483 = vld [vmem:[%s235 + $0x698] sm:$0xff]
        %v484 = vld [vmem:[%s235 + $0x6a0] sm:$0xff]
        %v485 = vld [vmem:[%s235 + $0x6a8] sm:$0xff]
        %v486 = vld [vmem:[%s235 + $0x6b0] sm:$0xff]
        %v487 = vld [vmem:[%s235 + $0x6b8] sm:$0xff]
        %v488 = vld [vmem:[%s235 + $0x6c0] sm:$0xff]
        %v489 = vld [vmem:[%s235 + $0x6c8] sm:$0xff]
        %v490 = vld [vmem:[%s235 + $0x6d0] sm:$0xff]
        %v491 = vld [vmem:[%s235 + $0x6d8] sm:$0xff]
        %v492 = vld [vmem:[%s235 + $0x6e0] sm:$0xff]
        %v493 = vld [vmem:[%s235 + $0x6e8] sm:$0xff]
        %v494 = vld [vmem:[%s235 + $0x6f0] sm:$0xff]
        %v495 = vld [vmem:[%s235 + $0x6f8] sm:$0xff]
        %v496 = vld [vmem:[%s235 + $0x700] sm:$0xff]
        %v497 = vld [vmem:[%s235 + $0x708] sm:$0xff]
        %v498 = vld [vmem:[%s235 + $0x710] sm:$0xff]
        %v499 = vld [vmem:[%s235 + $0x718] sm:$0xff]
        %v500 = vld [vmem:[%s235 + $0x720] sm:$0xff]
        %v501 = vld [vmem:[%s235 + $0x728] sm:$0xff]
        %v502 = vld [vmem:[%s235 + $0x730] sm:$0xff]
        %v503 = vld [vmem:[%s235 + $0x738] sm:$0xff]
        %v504 = vld [vmem:[%s235 + $0x740] sm:$0xff]
        %v505 = vld [vmem:[%s235 + $0x748] sm:$0xff]
        %v506 = vld [vmem:[%s235 + $0x750] sm:$0xff]
        %v507 = vld [vmem:[%s235 + $0x758] sm:$0xff]
        %v508 = vld [vmem:[%s235 + $0x760] sm:$0xff]
        %v509 = vld [vmem:[%s235 + $0x768] sm:$0xff]
        %v510 = vld [vmem:[%s235 + $0x770] sm:$0xff]
        %v511 = vld [vmem:[%s235 + $0x778] sm:$0xff]
        %v512 = vld [vmem:[%s235 + $0x780] sm:$0xff]
        %v513 = vld [vmem:[%s235 + $0x788] sm:$0xff]
        %v514 = vld [vmem:[%s235 + $0x790] sm:$0xff]
        %v515 = vld [vmem:[%s235 + $0x798] sm:$0xff]
        %v516 = vld [vmem:[%s235 + $0x7a0] sm:$0xff]
        %v517 = vld [vmem:[%s235 + $0x7a8] sm:$0xff]
        %v518 = vld [vmem:[%s235 + $0x7b0] sm:$0xff]
        %v519 = vld [vmem:[%s235 + $0x7b8] sm:$0xff]
        %v520 = vld [vmem:[%s235 + $0x7c0] sm:$0xff]
        %v521 = vld [vmem:[%s235 + $0x7c8] sm:$0xff]
        %v522 = vld [vmem:[%s235 + $0x7d0] sm:$0xff]
        %v523 = vld [vmem:[%s235 + $0x7d8] sm:$0xff]
        %v524 = vld [vmem:[%s235 + $0x7e0] sm:$0xff]
        %v525 = vld [vmem:[%s235 + $0x7e8] sm:$0xff]
        %v526 = vld [vmem:[%s235 + $0x7f0] sm:$0xff]
        %v527 = vld [vmem:[%s235 + $0x7f8] sm:$0xff]
        %528 = vmatpush.xpose.msra.mxu0 %v332
        %529 = vmatpush.xpose.msra.mxu0 %v328
        %530 = vmatpush.xpose.msra.mxu0 %v324
        %531 = vmatpush.xpose.msra.mxu0 %v320
        %532 = vmatpush.xpose.msra.mxu0 %v316
        %533 = vmatpush.xpose.msra.mxu0 %v312
        %534 = vmatpush.xpose.msra.mxu0 %v308
        %535 = vmatpush.xpose.msra.mxu0 %v304
        %536 = vmatpush.xpose.msra.mxu0 %v300
        %537 = vmatpush.xpose.msra.mxu0 %v296
        %538 = vmatpush.xpose.msra.mxu0 %v292
        %539 = vmatpush.xpose.msra.mxu0 %v288
        %540 = vmatpush.xpose.msra.mxu0 %v284
        %541 = vmatpush.xpose.msra.mxu0 %v280
        %542 = vmatpush.xpose.msra.mxu0 %v276
        %543 = vmatpush.xpose.msra.mxu0 %v272
        %544 = vmatmul.f32.gmra.mxu0 %v264
        %v545 = vpop.f32.mrf.mxu0
        %v546 = vadd.f32 0.0, %v545
        %547 = vmatmul.f32.gmra.mxu0 %v268
        %v548 = vpop.f32.mrf.mxu0
        %v549 = vadd.f32 0.0, %v548
        %550 = vdwg.mxu0
        %551 = vmatpush.xpose.msra.mxu0 %v333
        %552 = vmatpush.xpose.msra.mxu0 %v329
        %553 = vmatpush.xpose.msra.mxu0 %v325
        %554 = vmatpush.xpose.msra.mxu0 %v321
        %555 = vmatpush.xpose.msra.mxu0 %v317
        %556 = vmatpush.xpose.msra.mxu0 %v313
        %557 = vmatpush.xpose.msra.mxu0 %v309
        %558 = vmatpush.xpose.msra.mxu0 %v305
        %559 = vmatpush.xpose.msra.mxu0 %v301
        %560 = vmatpush.xpose.msra.mxu0 %v297
        %561 = vmatpush.xpose.msra.mxu0 %v293
        %562 = vmatpush.xpose.msra.mxu0 %v289
        %563 = vmatpush.xpose.msra.mxu0 %v285
        %564 = vmatpush.xpose.msra.mxu0 %v281
        %565 = vmatpush.xpose.msra.mxu0 %v277
        %566 = vmatpush.xpose.msra.mxu0 %v273
        %567 = vmatmul.f32.gmra.mxu0 %v265
        %v568 = vpop.f32.mrf.mxu0
        %v569 = vadd.f32 %v546, %v568
        %570 = vmatmul.f32.gmra.mxu0 %v269
        %v571 = vpop.f32.mrf.mxu0
        %v572 = vadd.f32 %v549, %v571
        %573 = vdwg.mxu0
        %574 = vmatpush.xpose.msra.mxu0 %v334
        %575 = vmatpush.xpose.msra.mxu0 %v330
        %576 = vmatpush.xpose.msra.mxu0 %v326
        %577 = vmatpush.xpose.msra.mxu0 %v322
        %578 = vmatpush.xpose.msra.mxu0 %v318
        %579 = vmatpush.xpose.msra.mxu0 %v314
        %580 = vmatpush.xpose.msra.mxu0 %v310
        %581 = vmatpush.xpose.msra.mxu0 %v306
        %582 = vmatpush.xpose.msra.mxu0 %v302
        %583 = vmatpush.xpose.msra.mxu0 %v298
        %584 = vmatpush.xpose.msra.mxu0 %v294
        %585 = vmatpush.xpose.msra.mxu0 %v290
        %586 = vmatpush.xpose.msra.mxu0 %v286
        %587 = vmatpush.xpose.msra.mxu0 %v282
        %588 = vmatpush.xpose.msra.mxu0 %v278
        %589 = vmatpush.xpose.msra.mxu0 %v274
        %590 = vmatmul.f32.gmra.mxu0 %v266
        %v591 = vpop.f32.mrf.mxu0
        %v592 = vadd.f32 %v569, %v591
        %593 = vmatmul.f32.gmra.mxu0 %v270
        %v594 = vpop.f32.mrf.mxu0
        %v595 = vadd.f32 %v572, %v594
        %596 = vdwg.mxu0
        %597 = vmatpush.xpose.msra.mxu0 %v335
        %598 = vmatpush.xpose.msra.mxu0 %v331
        %599 = vmatpush.xpose.msra.mxu0 %v327
        %600 = vmatpush.xpose.msra.mxu0 %v323
        %601 = vmatpush.xpose.msra.mxu0 %v319
        %602 = vmatpush.xpose.msra.mxu0 %v315
        %603 = vmatpush.xpose.msra.mxu0 %v311
        %604 = vmatpush.xpose.msra.mxu0 %v307
        %605 = vmatpush.xpose.msra.mxu0 %v303
        %606 = vmatpush.xpose.msra.mxu0 %v299
        %607 = vmatpush.xpose.msra.mxu0 %v295
        %608 = vmatpush.xpose.msra.mxu0 %v291
        %609 = vmatpush.xpose.msra.mxu0 %v287
        %610 = vmatpush.xpose.msra.mxu0 %v283
        %611 = vmatpush.xpose.msra.mxu0 %v279
        %612 = vmatpush.xpose.msra.mxu0 %v275
        %613 = vmatmul.f32.gmra.mxu0 %v267
        %v614 = vpop.f32.mrf.mxu0
        %v615 = vadd.f32 %v592, %v614
        %616 = vmatmul.f32.gmra.mxu0 %v271
        %v617 = vpop.f32.mrf.mxu0
        %v618 = vadd.f32 %v595, %v617
        %619 = vdwg.mxu0
        %620 = vmatpush.xpose.msra.mxu0 %v396
        %621 = vmatpush.xpose.msra.mxu0 %v392
        %622 = vmatpush.xpose.msra.mxu0 %v388
        %623 = vmatpush.xpose.msra.mxu0 %v384
        %624 = vmatpush.xpose.msra.mxu0 %v380
        %625 = vmatpush.xpose.msra.mxu0 %v376
        %626 = vmatpush.xpose.msra.mxu0 %v372
        %627 = vmatpush.xpose.msra.mxu0 %v368
        %628 = vmatpush.xpose.msra.mxu0 %v364
        %629 = vmatpush.xpose.msra.mxu0 %v360
        %630 = vmatpush.xpose.msra.mxu0 %v356
        %631 = vmatpush.xpose.msra.mxu0 %v352
        %632 = vmatpush.xpose.msra.mxu0 %v348
        %633 = vmatpush.xpose.msra.mxu0 %v344
        %634 = vmatpush.xpose.msra.mxu0 %v340
        %635 = vmatpush.xpose.msra.mxu0 %v336
        %636 = vmatmul.f32.gmra.mxu0 %v264
        %v637 = vpop.f32.mrf.mxu0
        %v638 = vadd.f32 0.0, %v637
        %639 = vmatmul.f32.gmra.mxu0 %v268
        %v640 = vpop.f32.mrf.mxu0
        %v641 = vadd.f32 0.0, %v640
        %642 = vdwg.mxu0
        %643 = vmatpush.xpose.msra.mxu0 %v397
        %644 = vmatpush.xpose.msra.mxu0 %v393
        %645 = vmatpush.xpose.msra.mxu0 %v389
        %646 = vmatpush.xpose.msra.mxu0 %v385
        %647 = vmatpush.xpose.msra.mxu0 %v381
        %648 = vmatpush.xpose.msra.mxu0 %v377
        %649 = vmatpush.xpose.msra.mxu0 %v373
        %650 = vmatpush.xpose.msra.mxu0 %v369
        %651 = vmatpush.xpose.msra.mxu0 %v365
        %652 = vmatpush.xpose.msra.mxu0 %v361
        %653 = vmatpush.xpose.msra.mxu0 %v357
        %654 = vmatpush.xpose.msra.mxu0 %v353
        %655 = vmatpush.xpose.msra.mxu0 %v349
        %656 = vmatpush.xpose.msra.mxu0 %v345
        %657 = vmatpush.xpose.msra.mxu0 %v341
        %658 = vmatpush.xpose.msra.mxu0 %v337
        %659 = vmatmul.f32.gmra.mxu0 %v265
        %v660 = vpop.f32.mrf.mxu0
        %v661 = vadd.f32 %v638, %v660
        %662 = vmatmul.f32.gmra.mxu0 %v269
        %v663 = vpop.f32.mrf.mxu0
        %v664 = vadd.f32 %v641, %v663
        %665 = vdwg.mxu0
        %666 = vmatpush.xpose.msra.mxu0 %v398
        %667 = vmatpush.xpose.msra.mxu0 %v394
        %668 = vmatpush.xpose.msra.mxu0 %v390
        %669 = vmatpush.xpose.msra.mxu0 %v386
        %670 = vmatpush.xpose.msra.mxu0 %v382
        %671 = vmatpush.xpose.msra.mxu0 %v378
        %672 = vmatpush.xpose.msra.mxu0 %v374
        %673 = vmatpush.xpose.msra.mxu0 %v370
        %674 = vmatpush.xpose.msra.mxu0 %v366
        %675 = vmatpush.xpose.msra.mxu0 %v362
        %676 = vmatpush.xpose.msra.mxu0 %v358
        %677 = vmatpush.xpose.msra.mxu0 %v354
        %678 = vmatpush.xpose.msra.mxu0 %v350
        %679 = vmatpush.xpose.msra.mxu0 %v346
        %680 = vmatpush.xpose.msra.mxu0 %v342
        %681 = vmatpush.xpose.msra.mxu0 %v338
        %682 = vmatmul.f32.gmra.mxu0 %v266
        %v683 = vpop.f32.mrf.mxu0
        %v684 = vadd.f32 %v661, %v683
        %685 = vmatmul.f32.gmra.mxu0 %v270
        %v686 = vpop.f32.mrf.mxu0
        %v687 = vadd.f32 %v664, %v686
        %688 = vdwg.mxu0
        %689 = vmatpush.xpose.msra.mxu0 %v399
        %690 = vmatpush.xpose.msra.mxu0 %v395
        %691 = vmatpush.xpose.msra.mxu0 %v391
        %692 = vmatpush.xpose.msra.mxu0 %v387
        %693 = vmatpush.xpose.msra.mxu0 %v383
        %694 = vmatpush.xpose.msra.mxu0 %v379
        %695 = vmatpush.xpose.msra.mxu0 %v375
        %696 = vmatpush.xpose.msra.mxu0 %v371
        %697 = vmatpush.xpose.msra.mxu0 %v367
        %698 = vmatpush.xpose.msra.mxu0 %v363
        %699 = vmatpush.xpose.msra.mxu0 %v359
        %700 = vmatpush.xpose.msra.mxu0 %v355
        %701 = vmatpush.xpose.msra.mxu0 %v351
        %702 = vmatpush.xpose.msra.mxu0 %v347
        %703 = vmatpush.xpose.msra.mxu0 %v343
        %704 = vmatpush.xpose.msra.mxu0 %v339
        %705 = vmatmul.f32.gmra.mxu0 %v267
        %v706 = vpop.f32.mrf.mxu0
        %v707 = vadd.f32 %v684, %v706
        %708 = vmatmul.f32.gmra.mxu0 %v271
        %v709 = vpop.f32.mrf.mxu0
        %v710 = vadd.f32 %v687, %v709
        %711 = vdwg.mxu0
        %712 = vmatpush.xpose.msra.mxu0 %v460
        %713 = vmatpush.xpose.msra.mxu0 %v456
        %714 = vmatpush.xpose.msra.mxu0 %v452
        %715 = vmatpush.xpose.msra.mxu0 %v448
        %716 = vmatpush.xpose.msra.mxu0 %v444
        %717 = vmatpush.xpose.msra.mxu0 %v440
        %718 = vmatpush.xpose.msra.mxu0 %v436
        %719 = vmatpush.xpose.msra.mxu0 %v432
        %720 = vmatpush.xpose.msra.mxu0 %v428
        %721 = vmatpush.xpose.msra.mxu0 %v424
        %722 = vmatpush.xpose.msra.mxu0 %v420
        %723 = vmatpush.xpose.msra.mxu0 %v416
        %724 = vmatpush.xpose.msra.mxu0 %v412
        %725 = vmatpush.xpose.msra.mxu0 %v408
        %726 = vmatpush.xpose.msra.mxu0 %v404
        %727 = vmatpush.xpose.msra.mxu0 %v400
        %728 = vmatmul.f32.gmra.mxu0 %v264
        %v729 = vpop.f32.mrf.mxu0
        %v730 = vadd.f32 0.0, %v729
        %731 = vmatmul.f32.gmra.mxu0 %v268
        %v732 = vpop.f32.mrf.mxu0
        %v733 = vadd.f32 0.0, %v732
        %734 = vdwg.mxu0
        %735 = vmatpush.xpose.msra.mxu0 %v461
        %736 = vmatpush.xpose.msra.mxu0 %v457
        %737 = vmatpush.xpose.msra.mxu0 %v453
        %738 = vmatpush.xpose.msra.mxu0 %v449
        %739 = vmatpush.xpose.msra.mxu0 %v445
        %740 = vmatpush.xpose.msra.mxu0 %v441
        %741 = vmatpush.xpose.msra.mxu0 %v437
        %742 = vmatpush.xpose.msra.mxu0 %v433
        %743 = vmatpush.xpose.msra.mxu0 %v429
        %744 = vmatpush.xpose.msra.mxu0 %v425
        %745 = vmatpush.xpose.msra.mxu0 %v421
        %746 = vmatpush.xpose.msra.mxu0 %v417
        %747 = vmatpush.xpose.msra.mxu0 %v413
        %748 = vmatpush.xpose.msra.mxu0 %v409
        %749 = vmatpush.xpose.msra.mxu0 %v405
        %750 = vmatpush.xpose.msra.mxu0 %v401
        %751 = vmatmul.f32.gmra.mxu0 %v265
        %v752 = vpop.f32.mrf.mxu0
        %v753 = vadd.f32 %v730, %v752
        %754 = vmatmul.f32.gmra.mxu0 %v269
        %v755 = vpop.f32.mrf.mxu0
        %v756 = vadd.f32 %v733, %v755
        %757 = vdwg.mxu0
        %758 = vmatpush.xpose.msra.mxu0 %v462
        %759 = vmatpush.xpose.msra.mxu0 %v458
        %760 = vmatpush.xpose.msra.mxu0 %v454
        %761 = vmatpush.xpose.msra.mxu0 %v450
        %762 = vmatpush.xpose.msra.mxu0 %v446
        %763 = vmatpush.xpose.msra.mxu0 %v442
        %764 = vmatpush.xpose.msra.mxu0 %v438
        %765 = vmatpush.xpose.msra.mxu0 %v434
        %766 = vmatpush.xpose.msra.mxu0 %v430
        %767 = vmatpush.xpose.msra.mxu0 %v426
        %768 = vmatpush.xpose.msra.mxu0 %v422
        %769 = vmatpush.xpose.msra.mxu0 %v418
        %770 = vmatpush.xpose.msra.mxu0 %v414
        %771 = vmatpush.xpose.msra.mxu0 %v410
        %772 = vmatpush.xpose.msra.mxu0 %v406
        %773 = vmatpush.xpose.msra.mxu0 %v402
        %774 = vmatmul.f32.gmra.mxu0 %v266
        %v775 = vpop.f32.mrf.mxu0
        %v776 = vadd.f32 %v753, %v775
        %777 = vmatmul.f32.gmra.mxu0 %v270
        %v778 = vpop.f32.mrf.mxu0
        %v779 = vadd.f32 %v756, %v778
        %780 = vdwg.mxu0
        %781 = vmatpush.xpose.msra.mxu0 %v463
        %782 = vmatpush.xpose.msra.mxu0 %v459
        %783 = vmatpush.xpose.msra.mxu0 %v455
        %784 = vmatpush.xpose.msra.mxu0 %v451
        %785 = vmatpush.xpose.msra.mxu0 %v447
        %786 = vmatpush.xpose.msra.mxu0 %v443
        %787 = vmatpush.xpose.msra.mxu0 %v439
        %788 = vmatpush.xpose.msra.mxu0 %v435
        %789 = vmatpush.xpose.msra.mxu0 %v431
        %790 = vmatpush.xpose.msra.mxu0 %v427
        %791 = vmatpush.xpose.msra.mxu0 %v423
        %792 = vmatpush.xpose.msra.mxu0 %v419
        %793 = vmatpush.xpose.msra.mxu0 %v415
        %794 = vmatpush.xpose.msra.mxu0 %v411
        %795 = vmatpush.xpose.msra.mxu0 %v407
        %796 = vmatpush.xpose.msra.mxu0 %v403
        %797 = vmatmul.f32.gmra.mxu0 %v267
        %v798 = vpop.f32.mrf.mxu0
        %v799 = vadd.f32 %v776, %v798
        %800 = vmatmul.f32.gmra.mxu0 %v271
        %v801 = vpop.f32.mrf.mxu0
        %v802 = vadd.f32 %v779, %v801
        %803 = vdwg.mxu0
        %804 = vmatpush.xpose.msra.mxu0 %v524
        %805 = vmatpush.xpose.msra.mxu0 %v520
        %806 = vmatpush.xpose.msra.mxu0 %v516
        %807 = vmatpush.xpose.msra.mxu0 %v512
        %808 = vmatpush.xpose.msra.mxu0 %v508
        %809 = vmatpush.xpose.msra.mxu0 %v504
        %810 = vmatpush.xpose.msra.mxu0 %v500
        %811 = vmatpush.xpose.msra.mxu0 %v496
        %812 = vmatpush.xpose.msra.mxu0 %v492
        %813 = vmatpush.xpose.msra.mxu0 %v488
        %814 = vmatpush.xpose.msra.mxu0 %v484
        %815 = vmatpush.xpose.msra.mxu0 %v480
        %816 = vmatpush.xpose.msra.mxu0 %v476
        %817 = vmatpush.xpose.msra.mxu0 %v472
        %818 = vmatpush.xpose.msra.mxu0 %v468
        %819 = vmatpush.xpose.msra.mxu0 %v464
        %820 = vmatmul.f32.gmra.mxu0 %v264
        %v821 = vpop.f32.mrf.mxu0
        %v822 = vadd.f32 0.0, %v821
        %823 = vmatmul.f32.gmra.mxu0 %v268
        %v824 = vpop.f32.mrf.mxu0
        %v825 = vadd.f32 0.0, %v824
        %826 = vdwg.mxu0
        %827 = vmatpush.xpose.msra.mxu0 %v525
        %828 = vmatpush.xpose.msra.mxu0 %v521
        %829 = vmatpush.xpose.msra.mxu0 %v517
        %830 = vmatpush.xpose.msra.mxu0 %v513
        %831 = vmatpush.xpose.msra.mxu0 %v509
        %832 = vmatpush.xpose.msra.mxu0 %v505
        %833 = vmatpush.xpose.msra.mxu0 %v501
        %834 = vmatpush.xpose.msra.mxu0 %v497
        %835 = vmatpush.xpose.msra.mxu0 %v493
        %836 = vmatpush.xpose.msra.mxu0 %v489
        %837 = vmatpush.xpose.msra.mxu0 %v485
        %838 = vmatpush.xpose.msra.mxu0 %v481
        %839 = vmatpush.xpose.msra.mxu0 %v477
        %840 = vmatpush.xpose.msra.mxu0 %v473
        %841 = vmatpush.xpose.msra.mxu0 %v469
        %842 = vmatpush.xpose.msra.mxu0 %v465
        %843 = vmatmul.f32.gmra.mxu0 %v265
        %v844 = vpop.f32.mrf.mxu0
        %v845 = vadd.f32 %v822, %v844
        %846 = vmatmul.f32.gmra.mxu0 %v269
        %v847 = vpop.f32.mrf.mxu0
        %v848 = vadd.f32 %v825, %v847
        %849 = vdwg.mxu0
        %850 = vmatpush.xpose.msra.mxu0 %v526
        %851 = vmatpush.xpose.msra.mxu0 %v522
        %852 = vmatpush.xpose.msra.mxu0 %v518
        %853 = vmatpush.xpose.msra.mxu0 %v514
        %854 = vmatpush.xpose.msra.mxu0 %v510
        %855 = vmatpush.xpose.msra.mxu0 %v506
        %856 = vmatpush.xpose.msra.mxu0 %v502
        %857 = vmatpush.xpose.msra.mxu0 %v498
        %858 = vmatpush.xpose.msra.mxu0 %v494
        %859 = vmatpush.xpose.msra.mxu0 %v490
        %860 = vmatpush.xpose.msra.mxu0 %v486
        %861 = vmatpush.xpose.msra.mxu0 %v482
        %862 = vmatpush.xpose.msra.mxu0 %v478
        %863 = vmatpush.xpose.msra.mxu0 %v474
        %864 = vmatpush.xpose.msra.mxu0 %v470
        %865 = vmatpush.xpose.msra.mxu0 %v466
        %866 = vmatmul.f32.gmra.mxu0 %v266
        %v867 = vpop.f32.mrf.mxu0
        %v868 = vadd.f32 %v845, %v867
        %869 = vmatmul.f32.gmra.mxu0 %v270
        %v870 = vpop.f32.mrf.mxu0
        %v871 = vadd.f32 %v848, %v870
        %872 = vdwg.mxu0
        %873 = vmatpush.xpose.msra.mxu0 %v527
        %874 = vmatpush.xpose.msra.mxu0 %v523
        %875 = vmatpush.xpose.msra.mxu0 %v519
        %876 = vmatpush.xpose.msra.mxu0 %v515
        %877 = vmatpush.xpose.msra.mxu0 %v511
        %878 = vmatpush.xpose.msra.mxu0 %v507
        %879 = vmatpush.xpose.msra.mxu0 %v503
        %880 = vmatpush.xpose.msra.mxu0 %v499
        %881 = vmatpush.xpose.msra.mxu0 %v495
        %882 = vmatpush.xpose.msra.mxu0 %v491
        %883 = vmatpush.xpose.msra.mxu0 %v487
        %884 = vmatpush.xpose.msra.mxu0 %v483
        %885 = vmatpush.xpose.msra.mxu0 %v479
        %886 = vmatpush.xpose.msra.mxu0 %v475
        %887 = vmatpush.xpose.msra.mxu0 %v471
        %888 = vmatpush.xpose.msra.mxu0 %v467
        %889 = vmatmul.f32.gmra.mxu0 %v267
        %v890 = vpop.f32.mrf.mxu0
        %v891 = vadd.f32 %v868, %v890
        %892 = vmatmul.f32.gmra.mxu0 %v271
        %v893 = vpop.f32.mrf.mxu0
        %v894 = vadd.f32 %v871, %v893
        %895 = vdwg.mxu0
        %v896 = vadd.f32 %v256, %v615
        %v897 = vadd.f32 %v257, %v707
        %v898 = vadd.f32 %v258, %v799
        %v899 = vadd.f32 %v259, %v891
        %v900 = vadd.f32 %v260, %v618
        %v901 = vadd.f32 %v261, %v710
        %v902 = vadd.f32 %v262, %v802
        %v903 = vadd.f32 %v263, %v894
        %904 = vst [vmem:[#allocation2] sm:$0xff] %v896
        %905 = vst [vmem:[#allocation2 + $0x8] sm:$0xff] %v897
        %906 = vst [vmem:[#allocation2 + $0x10] sm:$0xff] %v898
        %907 = vst [vmem:[#allocation2 + $0x18] sm:$0xff] %v899
        %908 = vst [vmem:[#allocation2 + $0x20] sm:$0xff] %v900
        %909 = vst [vmem:[#allocation2 + $0x28] sm:$0xff] %v901
        %910 = vst [vmem:[#allocation2 + $0x30] sm:$0xff] %v902
        %911 = vst [vmem:[#allocation2 + $0x38] sm:$0xff] %v903
        // Predicated region
        $region37: #{dot_product_classifier.1} parent=31 // pred_check
          %p912 = pneg %p244
        $region38: #{dot_product_classifier.1} parent=31 // pred_check_branch
          %914 = sbr.rel (%p912) target = $region40
        $region39: #{dot_product_classifier.1} parent=31 // pred_region
          %v915 = vld [vmem:[#allocation2] sm:$0xff]
          %v916 = vld [vmem:[#allocation2 + $0x8] sm:$0xff]
          %v917 = vld [vmem:[#allocation2 + $0x10] sm:$0xff]
          %v918 = vld [vmem:[#allocation2 + $0x18] sm:$0xff]
          %v919 = vld [vmem:[#allocation2 + $0x20] sm:$0xff]
          %v920 = vld [vmem:[#allocation2 + $0x28] sm:$0xff]
          %v921 = vld [vmem:[#allocation2 + $0x30] sm:$0xff]
          %v922 = vld [vmem:[#allocation2 + $0x38] sm:$0xff]
          %v923 = vld [vmem:[%s241] sm:$0xf]
          %v925 = vperm.slane %v923, 0
          %v926 = vperm.slane %v923, 1
          %v927 = vperm.slane %v923, 2
          %v928 = vperm.slane %v923, 3
          %v933 = vadd.f32 %v915, %v925
          %v934 = vadd.f32 %v916, %v926
          %v935 = vadd.f32 %v917, %v927
          %v936 = vadd.f32 %v918, %v928
          %v937 = vadd.f32 %v919, %v925
          %v938 = vadd.f32 %v920, %v926
          %v939 = vadd.f32 %v921, %v927
          %v940 = vadd.f32 %v922, %v928
          %v941 = vxor.u32 %v933, 2147483648
          %v942 = vxor.u32 %v934, 2147483648
          %v943 = vxor.u32 %v935, 2147483648
          %v944 = vxor.u32 %v936, 2147483648
          %v945 = vxor.u32 %v937, 2147483648
          %v946 = vxor.u32 %v938, 2147483648
          %v947 = vxor.u32 %v939, 2147483648
          %v948 = vxor.u32 %v940, 2147483648
          %v949 = vmul.f32 %v941, 1.442695
          %v950 = vpow.pop %v949
          %v951 = vmul.f32 %v942, 1.442695
          %v952 = vpow.pop %v951
          %v953 = vmul.f32 %v943, 1.442695
          %v954 = vpow.pop %v953
          %v955 = vmul.f32 %v944, 1.442695
          %v956 = vpow.pop %v955
          %v957 = vmul.f32 %v945, 1.442695
          %v958 = vpow.pop %v957
          %v959 = vmul.f32 %v946, 1.442695
          %v960 = vpow.pop %v959
          %v961 = vmul.f32 %v947, 1.442695
          %v962 = vpow.pop %v961
          %v963 = vmul.f32 %v948, 1.442695
          %v964 = vpow.pop %v963
          %v965 = vadd.f32 %v950, 1.0
          %v966 = vadd.f32 %v952, 1.0
          %v967 = vadd.f32 %v954, 1.0
          %v968 = vadd.f32 %v956, 1.0
          %v969 = vadd.f32 %v958, 1.0
          %v970 = vadd.f32 %v960, 1.0
          %v971 = vadd.f32 %v962, 1.0
          %v972 = vadd.f32 %v964, 1.0
          %v973 = vrcp.pop %v965
          %v974 = vmul.f32 %v965, %v973
          %v975 = vsub.f32 1.0, %v974
          %v976 = vmul.f32 %v973, %v975
          %v977 = vadd.f32 %v973, %v976
          %vm978 = vweird.f32 %v965
          %vm979 = vweird.f32 %v973
          %vm980 = vmor %vm978, %vm979
          %v981 = vsel %vm980, %v973, %v977
          %v982 = vand.u32 2147483647, %v965
          %vm983 = vcmp.eq.f32.partialorder %v982, 8.507059e+37
          %v984 = vand.u32 %v965, 2147483648
          %v985 = vor.u32 1.1754944e-38, %v984
          %v986 = vsel %vm983, %v985, %v981
          %v987 = vmul.f32 1.0, %v986
          %v988 = vrcp.pop %v966
          %v989 = vmul.f32 %v966, %v988
          %v990 = vsub.f32 1.0, %v989
          %v991 = vmul.f32 %v988, %v990
          %v992 = vadd.f32 %v988, %v991
          %vm993 = vweird.f32 %v966
          %vm994 = vweird.f32 %v988
          %vm995 = vmor %vm993, %vm994
          %v996 = vsel %vm995, %v988, %v992
          %v997 = vand.u32 2147483647, %v966
          %vm998 = vcmp.eq.f32.partialorder %v997, 8.507059e+37
          %v999 = vand.u32 %v966, 2147483648
          %v1000 = vor.u32 1.1754944e-38, %v999
          %v1001 = vsel %vm998, %v1000, %v996
          %v1002 = vmul.f32 1.0, %v1001
          %v1003 = vrcp.pop %v967
          %v1004 = vmul.f32 %v967, %v1003
          %v1005 = vsub.f32 1.0, %v1004
          %v1006 = vmul.f32 %v1003, %v1005
          %v1007 = vadd.f32 %v1003, %v1006
          %vm1008 = vweird.f32 %v967
          %vm1009 = vweird.f32 %v1003
          %vm1010 = vmor %vm1008, %vm1009
          %v1011 = vsel %vm1010, %v1003, %v1007
          %v1012 = vand.u32 2147483647, %v967
          %vm1013 = vcmp.eq.f32.partialorder %v1012, 8.507059e+37
          %v1014 = vand.u32 %v967, 2147483648
          %v1015 = vor.u32 1.1754944e-38, %v1014
          %v1016 = vsel %vm1013, %v1015, %v1011
          %v1017 = vmul.f32 1.0, %v1016
          %v1018 = vrcp.pop %v968
          %v1019 = vmul.f32 %v968, %v1018
          %v1020 = vsub.f32 1.0, %v1019
          %v1021 = vmul.f32 %v1018, %v1020
          %v1022 = vadd.f32 %v1018, %v1021
          %vm1023 = vweird.f32 %v968
          %vm1024 = vweird.f32 %v1018
          %vm1025 = vmor %vm1023, %vm1024
          %v1026 = vsel %vm1025, %v1018, %v1022
          %v1027 = vand.u32 2147483647, %v968
          %vm1028 = vcmp.eq.f32.partialorder %v1027, 8.507059e+37
          %v1029 = vand.u32 %v968, 2147483648
          %v1030 = vor.u32 1.1754944e-38, %v1029
          %v1031 = vsel %vm1028, %v1030, %v1026
          %v1032 = vmul.f32 1.0, %v1031
          %v1033 = vrcp.pop %v969
          %v1034 = vmul.f32 %v969, %v1033
          %v1035 = vsub.f32 1.0, %v1034
          %v1036 = vmul.f32 %v1033, %v1035
          %v1037 = vadd.f32 %v1033, %v1036
          %vm1038 = vweird.f32 %v969
          %vm1039 = vweird.f32 %v1033
          %vm1040 = vmor %vm1038, %vm1039
          %v1041 = vsel %vm1040, %v1033, %v1037
          %v1042 = vand.u32 2147483647, %v969
          %vm1043 = vcmp.eq.f32.partialorder %v1042, 8.507059e+37
          %v1044 = vand.u32 %v969, 2147483648
          %v1045 = vor.u32 1.1754944e-38, %v1044
          %v1046 = vsel %vm1043, %v1045, %v1041
          %v1047 = vmul.f32 1.0, %v1046
          %v1048 = vrcp.pop %v970
          %v1049 = vmul.f32 %v970, %v1048
          %v1050 = vsub.f32 1.0, %v1049
          %v1051 = vmul.f32 %v1048, %v1050
          %v1052 = vadd.f32 %v1048, %v1051
          %vm1053 = vweird.f32 %v970
          %vm1054 = vweird.f32 %v1048
          %vm1055 = vmor %vm1053, %vm1054
          %v1056 = vsel %vm1055, %v1048, %v1052
          %v1057 = vand.u32 2147483647, %v970
          %vm1058 = vcmp.eq.f32.partialorder %v1057, 8.507059e+37
          %v1059 = vand.u32 %v970, 2147483648
          %v1060 = vor.u32 1.1754944e-38, %v1059
          %v1061 = vsel %vm1058, %v1060, %v1056
          %v1062 = vmul.f32 1.0, %v1061
          %v1063 = vrcp.pop %v971
          %v1064 = vmul.f32 %v971, %v1063
          %v1065 = vsub.f32 1.0, %v1064
          %v1066 = vmul.f32 %v1063, %v1065
          %v1067 = vadd.f32 %v1063, %v1066
          %vm1068 = vweird.f32 %v971
          %vm1069 = vweird.f32 %v1063
          %vm1070 = vmor %vm1068, %vm1069
          %v1071 = vsel %vm1070, %v1063, %v1067
          %v1072 = vand.u32 2147483647, %v971
          %vm1073 = vcmp.eq.f32.partialorder %v1072, 8.507059e+37
          %v1074 = vand.u32 %v971, 2147483648
          %v1075 = vor.u32 1.1754944e-38, %v1074
          %v1076 = vsel %vm1073, %v1075, %v1071
          %v1077 = vmul.f32 1.0, %v1076
          %v1078 = vrcp.pop %v972
          %v1079 = vmul.f32 %v972, %v1078
          %v1080 = vsub.f32 1.0, %v1079
          %v1081 = vmul.f32 %v1078, %v1080
          %v1082 = vadd.f32 %v1078, %v1081
          %vm1083 = vweird.f32 %v972
          %vm1084 = vweird.f32 %v1078
          %vm1085 = vmor %vm1083, %vm1084
          %v1086 = vsel %vm1085, %v1078, %v1082
          %v1087 = vand.u32 2147483647, %v972
          %vm1088 = vcmp.eq.f32.partialorder %v1087, 8.507059e+37
          %v1089 = vand.u32 %v972, 2147483648
          %v1090 = vor.u32 1.1754944e-38, %v1089
          %v1091 = vsel %vm1088, %v1090, %v1086
          %v1092 = vmul.f32 1.0, %v1091
          %1093 = vst [vmem:[%s219] sm:$0xff] %v987
          %1094 = vst [vmem:[%s219 + $0x8] sm:$0xff] %v1002
          %1095 = vst [vmem:[%s219 + $0x10] sm:$0xff] %v1017
          %1096 = vst [vmem:[%s219 + $0x18] sm:$0xff] %v1032
          %1097 = vst [vmem:[%s219 + $0x20] sm:$0xff] %v1047
          %1098 = vst [vmem:[%s219 + $0x28] sm:$0xff] %v1062
          %1099 = vst [vmem:[%s219 + $0x30] sm:$0xff] %v1077
          %1100 = vst [vmem:[%s219 + $0x38] sm:$0xff] %v1092
        $region40: #{dot_product_classifier.1} parent=31 // pred_fallthru
          _
        %s1101 = sand.u32 %s117, 1
        %s1102 = scalar_lea.sflag [#allocation4], %s1101
        %s1103 = sand.u32 %s117, 1
        %s1104 = smul.addr %s1103, 64
        %s1105 = scalar_lea.vmem [#allocation3], %s1104
        // Predicated region
        $region41: #{dot_product_classifier.1} parent=31 // pred_check
          %p1106 = pneg %p127
        $region42: #{dot_product_classifier.1} parent=31 // pred_check_branch
          %1108 = sbr.rel (%p1106) target = $region44
        $region43: #{dot_product_classifier.1} parent=31 // pred_region
          %s1109 = smul.u32 4, %s21
          %1111 = vsyncadd %s1102, 0
          %s1112 = smul.addr %s1109, 8
          %s1113 = scalar_lea.hbm %s3, %s1112
          %s1114 = sshll.u32 %s1105, 4
          %s1115 = int_to_ptr.vmem [resolvable:$true] %s1114
          %s1116 = sshll.u32 %s1113, 4
          %s1117 = int_to_ptr.hbm [resolvable:$true] %s1116
          %1122 = dma.vmem_to_hbm [thread:$0]  %s1115, 1024, %s1117, %s1102, 512, 1024, 32
        $region44: #{dot_product_classifier.1} parent=31 // pred_fallthru
          _
      $region32: #{dot_product_classifier.1} parent=5 // pred_fallthru
        _
      %p1123 = scmp.le.s32.totalorder 2, %s12
      // Predicated region
      $region45: #{dot_product_classifier.1} parent=5 // pred_check
        %p1124 = pneg %p1123
      $region46: #{dot_product_classifier.1} parent=5 // pred_check_branch
        %1126 = sbr.rel (%p1124) target = $region48
      $region47: #{dot_product_classifier.1} parent=5 // pred_region
        %s1127 = ssub.s32 %s12, 2
        // Predicated region
        $region49: #{dot_product_classifier.1} parent=47 // pred_check
          %p1128 = pneg %p133
        $region50: #{dot_product_classifier.1} parent=47 // pred_check_branch
          %1130 = sbr.rel (%p1128) target = $region52
        $region51: #{dot_product_classifier.1} parent=47 // pred_region
          %s1131 = sand.u32 %s118, 1
          %s1132 = scalar_lea.sflag [#allocation4], %s1131
          %s1133 = sand.u32 %s118, 1
          %s1134 = smul.addr %s1133, 64
          %s1135 = scalar_lea.vmem [#allocation3], %s1134
          %1137 = dma.done %s1132, 1024
        $region52: #{dot_product_classifier.1} parent=47 // pred_fallthru
          _
      $region48: #{dot_product_classifier.1} parent=5 // pred_fallthru
        _
    $region6: #{dot_product_classifier.1} parent=1 // loop_footer
      %s16 = sadd.s32 1, %s12
    $region7: #{dot_product_classifier.1} parent=1 // loop_footer_branch
      %11 = sbr.rel target = $region3
    $region8: #{dot_product_classifier.1} parent=1 // loop_exit
      _
    %1138 = vsyncpa [#allocation4], 1
    %s1139 = scalar_lea.sflag [#allocation4], 1
    %1140 = vsyncpa %s1139, 1

</llo_original>
